<compile_context>
chip_gen: v7x
topology: tpu7x:2x2x1
jax: 0.10.0
libtpu: 0.0.40
codegen_flags: <defaults>
</compile_context>

<pallas_src>
import jax
import jax.numpy as jnp
from jax.experimental import pallas as pl
from jax.experimental.pallas import tpu as pltpu

LANE = 128      # lane width: hidden dims padded to this (lane-dense inner matmuls)
SUBLANE = 8     # f32 sublane count: batch tiles are multiples of this


def _round_up(n, m):
    return ((n + m - 1) // m) * m


def _hardswish(x):
    # torch.nn.Hardswish: x * relu6(x + 3) / 6.  hardswish(0) == 0 -> zero lane-padding is exact.
    return x * jnp.clip(x + 3.0, 0.0, 6.0) * (1.0 / 6.0)


def _mlp_kernel(x_ref,
                w1_ref, b1_ref,
                w2_ref, b2_ref,
                w3_ref, b3_ref,
                w4_ref, b4_ref,
                o_ref):
    """Whole 4-layer chain fused on one (block_rows, input_size) batch tile."""

    def layer(h, w_ref, b_ref):
        # MXU operands in the weight dtype (bf16 by default, all gens); f32 accumulate + f32 bias.
        return jnp.dot(h.astype(w_ref.dtype), w_ref[...],
                       preferred_element_type=jnp.float32) + b_ref[...]

    h = _hardswish(layer(x_ref[...], w1_ref, b1_ref))   # hardswish / adds stay f32 (VPU-safe on v5e)
    h = _hardswish(layer(h, w2_ref, b2_ref))
    h = _hardswish(layer(h, w3_ref, b3_ref))
    o_ref[...] = layer(h, w4_ref, b4_ref).astype(o_ref.dtype)


def mlp_forward(x, params, *, block_rows=None, use_bf16=True):
    """x: (B, input_size) float32 (natural, unpadded). params: dict from init_params."""
    B, in_features = x.shape
    num_classes = params["num_classes"]
    assert in_features == params["input_size"], "input feature mismatch"
    out_pad = params["w4"].shape[1]           # num_classes rounded up to 8

    # Pad batch only to the sublane (8); ragged final grid tile is clipped by Pallas.
    B_pad = _round_up(B, SUBLANE)
    if block_rows is None:
        # >=2 grid steps for non-trivial batches (v7x megacore), up to 2048-row tiles for big B.
        block_rows = min(2048, _round_up(pl.cdiv(B_pad, 2), SUBLANE))
    block_rows = max(SUBLANE, min(_round_up(block_rows, SUBLANE), B_pad))
    grid = (pl.cdiv(B_pad, block_rows),)

    x_p = x if B_pad == B else jnp.pad(x, ((0, B_pad - B), (0, 0)))   # at most 7 extra rows

    mxu_dtype = jnp.bfloat16 if use_bf16 else jnp.float32
    ws = [params[f"w{i}"].astype(mxu_dtype) for i in range(1, 5)]
    bs = [params[f"b{i}"].astype(jnp.float32) for i in range(1, 5)]

    def resident(arr):
        # Grid-invariant full-array block: constant index_map -> stays resident in VMEM.
        return pl.BlockSpec(arr.shape, lambda i: (0, 0))

    # Advisory cost hint for XLA's scheduler around this (tiny) custom call.
    k1, n1 = ws[0].shape
    n2, n3, n4 = ws[1].shape[1], ws[2].shape[1], ws[3].shape[1]
    flops = 2 * B_pad * (k1 * n1 + n1 * n2 + n2 * n3 + n3 * n4)
    bytes_accessed = (x_p.size * x_p.dtype.itemsize
                      + B_pad * out_pad * 4
                      + sum(w.size * w.dtype.itemsize for w in ws)
                      + sum(b.size * b.dtype.itemsize for b in bs))

    out = pl.pallas_call(
        _mlp_kernel,
        out_shape=jax.ShapeDtypeStruct((B_pad, out_pad), jnp.float32),
        grid_spec=pl.GridSpec(
            grid=grid,
            in_specs=[pl.BlockSpec((block_rows, in_features), lambda i: (i, 0))]
                     + [spec for w, b in zip(ws, bs) for spec in (resident(w), resident(b))],
            out_specs=pl.BlockSpec((block_rows, out_pad), lambda i: (i, 0)),
        ),
        compiler_params=pltpu.CompilerParams(
            dimension_semantics=("parallel",)),   # batch tiles shard across v7x's 2 TensorCores
        cost_estimate=pl.CostEstimate(flops=int(flops), transcendentals=0,
                                      bytes_accessed=int(bytes_accessed)),
    )(x_p, ws[0], bs[0], ws[1], bs[1], ws[2], bs[2], ws[3], bs[3])

    return out[:B, :num_classes]


def init_params(key, input_size, hidden_size, num_classes):
    """nn.Linear-style init (uniform +/- 1/sqrt(fan_in)); weights stored as (in, out).
    w1 keeps its natural input dim (x is loaded unpadded); hidden dims are padded to 128; the
    final layer's output dim is padded only to 8 so the output HBM stream stays narrow."""
    dims = [input_size, hidden_size, hidden_size // 2, hidden_size // 4, num_classes]
    params = {"num_classes": num_classes, "input_size": input_size}
    for li in range(4):
        fan_in, fan_out = dims[li], dims[li + 1]
        key, kw, kb = jax.random.split(key, 3)
        bound = float(fan_in) ** -0.5
        w = jax.random.uniform(kw, (fan_in, fan_out), jnp.float32, -bound, bound)
        b = jax.random.uniform(kb, (1, fan_out), jnp.float32, -bound, bound)
        in_p = fan_in if li == 0 else _round_up(fan_in, LANE)
        out_p = _round_up(fan_out, LANE) if li < 3 else _round_up(fan_out, SUBLANE)
        params[f"w{li + 1}"] = jnp.pad(w, ((0, in_p - fan_in), (0, out_p - fan_out)))
        params[f"b{li + 1}"] = jnp.pad(b, ((0, 0), (0, out_p - fan_out)))
    return params


def reference_forward(x, params):
    """Pure-JAX reference on the same (padded) parameters, sliced to the real classes."""
    h = _hardswish(x @ params["w1"] + params["b1"])
    h = _hardswish(h @ params["w2"] + params["b2"])
    h = _hardswish(h @ params["w3"] + params["b3"])
    h = h @ params["w4"] + params["b4"]
    return h[:, :params["num_classes"]]


if __name__ == "__main__":
    input_size, hidden_size, num_classes = 32, 32, 4

    key = jax.random.PRNGKey(0)
    key, kx, kx2 = jax.random.split(key, 3)
    params = init_params(key, input_size, hidden_size, num_classes)

    # --- small batch (single grid step) ---
    batch = 8
    x = jax.random.normal(kx, (batch, input_size), jnp.float32)
    ref = reference_forward(x, params)

    out_f32 = jax.block_until_ready(mlp_forward(x, params, use_bf16=False))
    assert out_f32.shape == (batch, num_classes)
    assert jnp.allclose(out_f32, ref, atol=1e-5, rtol=1e-5), "f32 mismatch vs JAX reference"

    out_bf16 = jax.block_until_ready(mlp_forward(x, params, use_bf16=True))
    assert out_bf16.shape == (batch, num_classes)
    assert jnp.allclose(out_bf16, ref, atol=5e-2, rtol=5e-2), "bf16 mismatch vs JAX reference"

    # --- larger batch: multi-step grid with a ragged (clipped) final tile ---
    batch2 = 24                                   # default block_rows -> 16, grid = (2,)
    x2 = jax.random.normal(kx2, (batch2, input_size), jnp.float32)
    ref2 = reference_forward(x2, params)
    out2 = jax.block_until_ready(mlp_forward(x2, params, use_bf16=False))
    assert out2.shape == (batch2, num_classes)
    assert jnp.allclose(out2, ref2, atol=1e-5, rtol=1e-5), "multi-tile f32 mismatch vs reference"

    print("KERNEL_OK")
</pallas_src>

<mosaic_0001>
module attributes {stable_mosaic.version = 11 : i64} {
  func.func @_mlp_kernel(%arg0: i32, %arg1: memref<8x32xf32, #tpu.memory_space<vmem>>, %arg2: memref<32x128xf32, #tpu.memory_space<vmem>>, %arg3: memref<1x128xf32, #tpu.memory_space<vmem>>, %arg4: memref<128x128xf32, #tpu.memory_space<vmem>>, %arg5: memref<1x128xf32, #tpu.memory_space<vmem>>, %arg6: memref<128x128xf32, #tpu.memory_space<vmem>>, %arg7: memref<1x128xf32, #tpu.memory_space<vmem>>, %arg8: memref<128x8xf32, #tpu.memory_space<vmem>>, %arg9: memref<1x8xf32, #tpu.memory_space<vmem>>, %arg10: memref<8x8xf32, #tpu.memory_space<vmem>>) attributes {dimension_semantics = [#tpu.dimension_semantics<parallel>], iteration_bounds = array<i64: 1>, scalar_prefetch = 0 : i64, scratch_operands = 0 : i64, tpu.core_type = #tpu.core_type<tc>, window_params = [{transform_indices = @transform_0, window_bounds = array<i64: 8, 32>}, {pipeline_mode = #tpu.pipeline_mode<synchronous>, transform_indices = @transform_1, window_bounds = array<i64: 32, 128>}, {pipeline_mode = #tpu.pipeline_mode<synchronous>, transform_indices = @transform_2, window_bounds = array<i64: 1, 128>}, {pipeline_mode = #tpu.pipeline_mode<synchronous>, transform_indices = @transform_3, window_bounds = array<i64: 128, 128>}, {pipeline_mode = #tpu.pipeline_mode<synchronous>, transform_indices = @transform_4, window_bounds = array<i64: 1, 128>}, {pipeline_mode = #tpu.pipeline_mode<synchronous>, transform_indices = @transform_5, window_bounds = array<i64: 128, 128>}, {pipeline_mode = #tpu.pipeline_mode<synchronous>, transform_indices = @transform_6, window_bounds = array<i64: 1, 128>}, {pipeline_mode = #tpu.pipeline_mode<synchronous>, transform_indices = @transform_7, window_bounds = array<i64: 128, 8>}, {pipeline_mode = #tpu.pipeline_mode<synchronous>, transform_indices = @transform_8, window_bounds = array<i64: 1, 8>}, {transform_indices = @transform_9, window_bounds = array<i64: 8, 8>}]} {
    %c0 = arith.constant 0 : index
    %c0_0 = arith.constant 0 : index
    %0 = vector.load %arg1[%c0, %c0_0] : memref<8x32xf32, #tpu.memory_space<vmem>>, vector<8x32xf32>
    %c0_1 = arith.constant 0 : index
    %c0_2 = arith.constant 0 : index
    %1 = vector.load %arg2[%c0_1, %c0_2] : memref<32x128xf32, #tpu.memory_space<vmem>>, vector<32x128xf32>
    %cst = arith.constant dense<0.000000e+00> : vector<8x128xf32>
    %2 = tpu.matmul %0, %1, %cst {dimension_numbers = #tpu.dot_dimension_numbers<[1], [0], [0], [1], [0, 0, 1, 1], [], []>} : vector<8x32xf32>, vector<32x128xf32>, vector<8x128xf32> -> vector<8x128xf32>
    %c0_3 = arith.constant 0 : index
    %c0_4 = arith.constant 0 : index
    %3 = vector.load %arg3[%c0_3, %c0_4] : memref<1x128xf32, #tpu.memory_space<vmem>>, vector<1x128xf32>
    %4 = vector.broadcast %3 : vector<1x128xf32> to vector<8x128xf32>
    %5 = arith.addf %2, %4 : vector<8x128xf32>
    %cst_5 = arith.constant 3.000000e+00 : f32
    %6 = vector.broadcast %cst_5 : f32 to vector<8x128xf32>
    %7 = arith.addf %5, %6 : vector<8x128xf32>
    %cst_6 = arith.constant 0.000000e+00 : f32
    %cst_7 = arith.constant 6.000000e+00 : f32
    %8 = vector.broadcast %cst_6 : f32 to vector<8x128xf32>
    %9 = arith.maximumf %8, %7 : vector<8x128xf32>
    %10 = vector.broadcast %cst_7 : f32 to vector<8x128xf32>
    %11 = arith.minimumf %10, %9 : vector<8x128xf32>
    %12 = arith.mulf %5, %11 : vector<8x128xf32>
    %cst_8 = arith.constant 0.166666672 : f32
    %13 = vector.broadcast %cst_8 : f32 to vector<8x128xf32>
    %14 = arith.mulf %12, %13 : vector<8x128xf32>
    %c0_9 = arith.constant 0 : index
    %c0_10 = arith.constant 0 : index
    %15 = vector.load %arg4[%c0_9, %c0_10] : memref<128x128xf32, #tpu.memory_space<vmem>>, vector<128x128xf32>
    %cst_11 = arith.constant dense<0.000000e+00> : vector<8x128xf32>
    %16 = tpu.matmul %14, %15, %cst_11 {dimension_numbers = #tpu.dot_dimension_numbers<[1], [0], [0], [1], [0, 0, 1, 1], [], []>} : vector<8x128xf32>, vector<128x128xf32>, vector<8x128xf32> -> vector<8x128xf32>
    %c0_12 = arith.constant 0 : index
    %c0_13 = arith.constant 0 : index
    %17 = vector.load %arg5[%c0_12, %c0_13] : memref<1x128xf32, #tpu.memory_space<vmem>>, vector<1x128xf32>
    %18 = vector.broadcast %17 : vector<1x128xf32> to vector<8x128xf32>
    %19 = arith.addf %16, %18 : vector<8x128xf32>
    %cst_14 = arith.constant 3.000000e+00 : f32
    %20 = vector.broadcast %cst_14 : f32 to vector<8x128xf32>
    %21 = arith.addf %19, %20 : vector<8x128xf32>
    %cst_15 = arith.constant 0.000000e+00 : f32
    %cst_16 = arith.constant 6.000000e+00 : f32
    %22 = vector.broadcast %cst_15 : f32 to vector<8x128xf32>
    %23 = arith.maximumf %22, %21 : vector<8x128xf32>
    %24 = vector.broadcast %cst_16 : f32 to vector<8x128xf32>
    %25 = arith.minimumf %24, %23 : vector<8x128xf32>
    %26 = arith.mulf %19, %25 : vector<8x128xf32>
    %cst_17 = arith.constant 0.166666672 : f32
    %27 = vector.broadcast %cst_17 : f32 to vector<8x128xf32>
    %28 = arith.mulf %26, %27 : vector<8x128xf32>
    %c0_18 = arith.constant 0 : index
    %c0_19 = arith.constant 0 : index
    %29 = vector.load %arg6[%c0_18, %c0_19] : memref<128x128xf32, #tpu.memory_space<vmem>>, vector<128x128xf32>
    %cst_20 = arith.constant dense<0.000000e+00> : vector<8x128xf32>
    %30 = tpu.matmul %28, %29, %cst_20 {dimension_numbers = #tpu.dot_dimension_numbers<[1], [0], [0], [1], [0, 0, 1, 1], [], []>} : vector<8x128xf32>, vector<128x128xf32>, vector<8x128xf32> -> vector<8x128xf32>
    %c0_21 = arith.constant 0 : index
    %c0_22 = arith.constant 0 : index
    %31 = vector.load %arg7[%c0_21, %c0_22] : memref<1x128xf32, #tpu.memory_space<vmem>>, vector<1x128xf32>
    %32 = vector.broadcast %31 : vector<1x128xf32> to vector<8x128xf32>
    %33 = arith.addf %30, %32 : vector<8x128xf32>
    %cst_23 = arith.constant 3.000000e+00 : f32
    %34 = vector.broadcast %cst_23 : f32 to vector<8x128xf32>
    %35 = arith.addf %33, %34 : vector<8x128xf32>
    %cst_24 = arith.constant 0.000000e+00 : f32
    %cst_25 = arith.constant 6.000000e+00 : f32
    %36 = vector.broadcast %cst_24 : f32 to vector<8x128xf32>
    %37 = arith.maximumf %36, %35 : vector<8x128xf32>
    %38 = vector.broadcast %cst_25 : f32 to vector<8x128xf32>
    %39 = arith.minimumf %38, %37 : vector<8x128xf32>
    %40 = arith.mulf %33, %39 : vector<8x128xf32>
    %cst_26 = arith.constant 0.166666672 : f32
    %41 = vector.broadcast %cst_26 : f32 to vector<8x128xf32>
    %42 = arith.mulf %40, %41 : vector<8x128xf32>
    %c0_27 = arith.constant 0 : index
    %c0_28 = arith.constant 0 : index
    %43 = vector.load %arg8[%c0_27, %c0_28] : memref<128x8xf32, #tpu.memory_space<vmem>>, vector<128x8xf32>
    %cst_29 = arith.constant dense<0.000000e+00> : vector<8x8xf32>
    %44 = tpu.matmul %42, %43, %cst_29 {dimension_numbers = #tpu.dot_dimension_numbers<[1], [0], [0], [1], [0, 0, 1, 1], [], []>} : vector<8x128xf32>, vector<128x8xf32>, vector<8x8xf32> -> vector<8x8xf32>
    %c0_30 = arith.constant 0 : index
    %c0_31 = arith.constant 0 : index
    %45 = vector.load %arg9[%c0_30, %c0_31] : memref<1x8xf32, #tpu.memory_space<vmem>>, vector<1x8xf32>
    %46 = vector.broadcast %45 : vector<1x8xf32> to vector<8x8xf32>
    %47 = arith.addf %44, %46 : vector<8x8xf32>
    %c0_32 = arith.constant 0 : index
    %c0_33 = arith.constant 0 : index
    %48 = vector.load %arg10[%c0_32, %c0_33] : memref<8x8xf32, #tpu.memory_space<vmem>>, vector<8x8xf32>
    tpu.vector_store %arg10[%c0_32, %c0_33], %47 {strides = array<i32>} : memref<8x8xf32, #tpu.memory_space<vmem>>, vector<8x8xf32>,
    return
  }
  func.func @transform_0(%arg0: i32) -> (i32, i32) {
    %c0_i32 = arith.constant 0 : i32
    %c0_i32_0 = arith.constant 0 : i32
    return %arg0, %c0_i32 : i32, i32
  }
  func.func @transform_1(%arg0: i32) -> (i32, i32) {
    %c0_i32 = arith.constant 0 : i32
    %c0_i32_0 = arith.constant 0 : i32
    %c0_i32_1 = arith.constant 0 : i32
    return %c0_i32, %c0_i32_0 : i32, i32
  }
  func.func @transform_2(%arg0: i32) -> (i32, i32) {
    %c0_i32 = arith.constant 0 : i32
    %c0_i32_0 = arith.constant 0 : i32
    %c0_i32_1 = arith.constant 0 : i32
    return %c0_i32, %c0_i32_0 : i32, i32
  }
  func.func @transform_3(%arg0: i32) -> (i32, i32) {
    %c0_i32 = arith.constant 0 : i32
    %c0_i32_0 = arith.constant 0 : i32
    %c0_i32_1 = arith.constant 0 : i32
    return %c0_i32, %c0_i32_0 : i32, i32
  }
  func.func @transform_4(%arg0: i32) -> (i32, i32) {
    %c0_i32 = arith.constant 0 : i32
    %c0_i32_0 = arith.constant 0 : i32
    %c0_i32_1 = arith.constant 0 : i32
    return %c0_i32, %c0_i32_0 : i32, i32
  }
  func.func @transform_5(%arg0: i32) -> (i32, i32) {
    %c0_i32 = arith.constant 0 : i32
    %c0_i32_0 = arith.constant 0 : i32
    %c0_i32_1 = arith.constant 0 : i32
    return %c0_i32, %c0_i32_0 : i32, i32
  }
  func.func @transform_6(%arg0: i32) -> (i32, i32) {
    %c0_i32 = arith.constant 0 : i32
    %c0_i32_0 = arith.constant 0 : i32
    %c0_i32_1 = arith.constant 0 : i32
    return %c0_i32, %c0_i32_0 : i32, i32
  }
  func.func @transform_7(%arg0: i32) -> (i32, i32) {
    %c0_i32 = arith.constant 0 : i32
    %c0_i32_0 = arith.constant 0 : i32
    %c0_i32_1 = arith.constant 0 : i32
    return %c0_i32, %c0_i32_0 : i32, i32
  }
  func.func @transform_8(%arg0: i32) -> (i32, i32) {
    %c0_i32 = arith.constant 0 : i32
    %c0_i32_0 = arith.constant 0 : i32
    %c0_i32_1 = arith.constant 0 : i32
    return %c0_i32, %c0_i32_0 : i32, i32
  }
  func.func @transform_9(%arg0: i32) -> (i32, i32) {
    %c0_i32 = arith.constant 0 : i32
    %c0_i32_0 = arith.constant 0 : i32
    return %arg0, %c0_i32 : i32, i32
  }
}

</mosaic_0001>

<llo_original>
// kernel: tpu_custom_call.1
$region0: #{tpu_custom_call.1}
  #allocation0 [shape = 'u32[]', space=smem, size = 0x4, offset = 0x4, fixed_abs, tag = 'smem constant byte address 0x4 - core index']
  #allocation1 [shape = 'u32[144,128]{1,0:T(1,128)}', space=vmem, size = 0x12000, scoped, tag = 'internal scratch']
  %s0 = inlined_call_operand.vmem [shape: f32[8,32], index: 0, kind: input, shape index: {}]
  %s1 = inlined_call_operand.hbm [shape: f32[32,128], index: 1, kind: input, shape index: {}]
  %s2 = inlined_call_operand.vmem [shape: f32[1,128], index: 2, kind: input, shape index: {}]
  %s3 = inlined_call_operand.vmem [shape: f32[128,128], index: 3, kind: input, shape index: {}]
  %s4 = inlined_call_operand.vmem [shape: f32[1,128], index: 4, kind: input, shape index: {}]
  %s5 = inlined_call_operand.hbm [shape: f32[128,128], index: 5, kind: input, shape index: {}]
  %s6 = inlined_call_operand.vmem [shape: f32[1,128], index: 6, kind: input, shape index: {}]
  %s7 = inlined_call_operand.vmem [shape: f32[128,8], index: 7, kind: input, shape index: {}]
  %s8 = inlined_call_operand.vmem [shape: f32[1,8], index: 8, kind: input, shape index: {}]
  %s9 = inlined_call_operand.hbm [shape: f32[8,8], index: 9, kind: output, shape index: {}]
  %s10 = sld [smem:[#allocation0]]
  $region54: #{tpu_custom_call.1} parent=0
    _
  %s12 = ssub.s32 1, %s10
  %s13 = scalar_select 0, %s12, %s10
  $region1: #{tpu_custom_call.1} parent=0
    #allocation2 [shape = 'u8[16384]{0}', space=vmem, size = 0x4000, scoped, tag = 'input window, operand 1, single buffered']
    #allocation3 [shape = 's32[1]{0}', space=sflag, size = 0x4, scoped, tag = 'scoped memory for tpu_custom_call.1']
    #allocation4 [shape = 's32[1]{0}', space=sflag, size = 0x4, scoped, tag = 'scoped memory for tpu_custom_call.1']
    #allocation5 [shape = 'u8[65536]{0}', space=vmem, size = 0x10000, scoped, tag = 'input window, operand 5, single buffered']
    #allocation6 [shape = 's32[1]{0}', space=sflag, size = 0x4, scoped, tag = 'scoped memory for tpu_custom_call.1']
    #allocation7 [shape = 'u8[4096]{0}', space=vmem, size = 0x1000, scoped, tag = 'output window, operand 0, single buffered']
    %14 = vsyncpa [#allocation3], 0
    %15 = vsyncpa [#allocation6], 0
    %16 = vsyncpa [#allocation4], 0
    // Predicated region
    $region2: #{tpu_custom_call.1} parent=1 // pred_check
      _
    $region3: #{tpu_custom_call.1} parent=1 // pred_check_branch
      %18 = sbr.rel (0) target = $region5
    $region4: #{tpu_custom_call.1} parent=1 // pred_region
      _
    $region5: #{tpu_custom_call.1} parent=1 // pred_fallthru
      _
    // Predicated region
    $region6: #{tpu_custom_call.1} parent=1 // pred_check
      _
    $region7: #{tpu_custom_call.1} parent=1 // pred_check_branch
      %20 = sbr.rel (0) target = $region9
    $region8: #{tpu_custom_call.1} parent=1 // pred_region
      %s22 = ssub.s32 512, 512
      %23 = vsyncadd [#allocation3], %s22
      %s24 = sshll.u32 [#allocation2], 4
      %s25 = int_to_ptr.vmem [resolvable:$true] %s24
      %30 = dma.hbm_to_vmem [thread:$0]  %s1, 512, %s25, [#allocation3], 128, 128, 8
    $region9: #{tpu_custom_call.1} parent=1 // pred_fallthru
      _
    // Predicated region
    $region10: #{tpu_custom_call.1} parent=1 // pred_check
      _
    $region11: #{tpu_custom_call.1} parent=1 // pred_check_branch
      %32 = sbr.rel (0) target = $region13
    $region12: #{tpu_custom_call.1} parent=1 // pred_region
      _
    $region13: #{tpu_custom_call.1} parent=1 // pred_fallthru
      _
    // Predicated region
    $region14: #{tpu_custom_call.1} parent=1 // pred_check
      _
    $region15: #{tpu_custom_call.1} parent=1 // pred_check_branch
      %34 = sbr.rel (0) target = $region17
    $region16: #{tpu_custom_call.1} parent=1 // pred_region
      _
    $region17: #{tpu_custom_call.1} parent=1 // pred_fallthru
      _
    // Predicated region
    $region18: #{tpu_custom_call.1} parent=1 // pred_check
      _
    $region19: #{tpu_custom_call.1} parent=1 // pred_check_branch
      %36 = sbr.rel (0) target = $region21
    $region20: #{tpu_custom_call.1} parent=1 // pred_region
      _
    $region21: #{tpu_custom_call.1} parent=1 // pred_fallthru
      _
    // Predicated region
    $region22: #{tpu_custom_call.1} parent=1 // pred_check
      _
    $region23: #{tpu_custom_call.1} parent=1 // pred_check_branch
      %38 = sbr.rel (0) target = $region25
    $region24: #{tpu_custom_call.1} parent=1 // pred_region
      %s40 = ssub.s32 2048, 2048
      %41 = vsyncadd [#allocation6], %s40
      %s42 = sshll.u32 [#allocation5], 4
      %s43 = int_to_ptr.vmem [resolvable:$true] %s42
      %48 = dma.hbm_to_vmem [thread:$0]  %s5, 2048, %s43, [#allocation6], 128, 128, 8
    $region25: #{tpu_custom_call.1} parent=1 // pred_fallthru
      _
    // Predicated region
    $region26: #{tpu_custom_call.1} parent=1 // pred_check
      _
    $region27: #{tpu_custom_call.1} parent=1 // pred_check_branch
      %50 = sbr.rel (0) target = $region29
    $region28: #{tpu_custom_call.1} parent=1 // pred_region
      _
    $region29: #{tpu_custom_call.1} parent=1 // pred_fallthru
      _
    // Predicated region
    $region30: #{tpu_custom_call.1} parent=1 // pred_check
      _
    $region31: #{tpu_custom_call.1} parent=1 // pred_check_branch
      %52 = sbr.rel (0) target = $region33
    $region32: #{tpu_custom_call.1} parent=1 // pred_region
      _
    $region33: #{tpu_custom_call.1} parent=1 // pred_fallthru
      _
    // Predicated region
    $region34: #{tpu_custom_call.1} parent=1 // pred_check
      _
    $region35: #{tpu_custom_call.1} parent=1 // pred_check_branch
      %54 = sbr.rel (0) target = $region37
    $region36: #{tpu_custom_call.1} parent=1 // pred_region
      _
    $region37: #{tpu_custom_call.1} parent=1 // pred_fallthru
      _
    // Predicated region
    $region38: #{tpu_custom_call.1} parent=1 // pred_check
      _
    $region39: #{tpu_custom_call.1} parent=1 // pred_check_branch
      %56 = sbr.rel (0) target = $region41
    $region40: #{tpu_custom_call.1} parent=1 // pred_region
      %57 = dma.done [#allocation3], 512
    $region41: #{tpu_custom_call.1} parent=1 // pred_fallthru
      _
    // Predicated region
    $region42: #{tpu_custom_call.1} parent=1 // pred_check
      _
    $region43: #{tpu_custom_call.1} parent=1 // pred_check_branch
      %59 = sbr.rel (0) target = $region45
    $region44: #{tpu_custom_call.1} parent=1 // pred_region
      %60 = dma.done [#allocation6], 2048
    $region45: #{tpu_custom_call.1} parent=1 // pred_fallthru
      _
    %v61 = vld [vmem:[%s0] sm:$0xff]
    %v62 = vld [vmem:[#allocation2] sm:$0xff]
    %v63 = vld [vmem:[#allocation2 + $0x8] sm:$0xff]
    %v64 = vld [vmem:[#allocation2 + $0x10] sm:$0xff]
    %v65 = vld [vmem:[#allocation2 + $0x18] sm:$0xff]
    %v66 = vld [vmem:[%s2] sm:$0x1]
    %v68 = vlaneseq
    %v69 = vshrl.u32 %v68, 7
    %v70 = vsub.s32 0, %v69
    %v71 = vrot.slane %v66, %v70
    %vm73 = vcmask 261120
    %v75 = vsel %vm73, %v61, 0
    %77 = vmatprep.subr.mxu0 0.0
    %78 = vmatpush1.msra.mxu0 %v62
    %79 = vmatprep.subr.mxu0 0.0
    %80 = vmatpush1.msra.mxu0 %v63
    %81 = vmatprep.subr.mxu0 0.0
    %82 = vmatpush1.msra.mxu0 %v64
    %83 = vmatprep.subr.mxu0 0.0
    %84 = vmatpush1.msra.mxu0 %v65
    %85 = vmatprep.subr.mxu0 0.0
    %86 = vmatpush1.msra.mxu0 0.0
    %87 = vmatprep.subr.mxu0 0.0
    %88 = vmatpush1.msra.mxu0 0.0
    %89 = vmatprep.subr.mxu0 0.0
    %90 = vmatpush1.msra.mxu0 0.0
    %91 = vmatprep.subr.mxu0 0.0
    %92 = vmatpush1.msra.mxu0 0.0
    %93 = vmatprep.subr.mxu0 0.0
    %94 = vmatpush1.msra.mxu0 0.0
    %95 = vmatprep.subr.mxu0 0.0
    %96 = vmatpush1.msra.mxu0 0.0
    %97 = vmatprep.subr.mxu0 0.0
    %98 = vmatpush1.msra.mxu0 0.0
    %99 = vmatprep.subr.mxu0 0.0
    %100 = vmatpush1.msra.mxu0 0.0
    %101 = vmatprep.subr.mxu0 0.0
    %102 = vmatpush1.msra.mxu0 0.0
    %103 = vmatprep.subr.mxu0 0.0
    %104 = vmatpush1.msra.mxu0 0.0
    %105 = vmatprep.subr.mxu0 0.0
    %106 = vmatpush1.msra.mxu0 0.0
    %107 = vmatprep.subr.mxu0 0.0
    %108 = vmatpush1.msra.mxu0 0.0
    %109 = vmatprep.subr.mxu0 0.0
    %110 = vmatpush1.msra.mxu0 0.0
    %111 = vmatprep.subr.mxu0 0.0
    %112 = vmatpush1.msra.mxu0 0.0
    %113 = vmatprep.subr.mxu0 0.0
    %114 = vmatpush1.msra.mxu0 0.0
    %115 = vmatprep.subr.mxu0 0.0
    %116 = vmatpush1.msra.mxu0 0.0
    %117 = vmatprep.subr.mxu0 0.0
    %118 = vmatpush1.msra.mxu0 0.0
    %119 = vmatprep.subr.mxu0 0.0
    %120 = vmatpush1.msra.mxu0 0.0
    %121 = vmatprep.subr.mxu0 0.0
    %122 = vmatpush1.msra.mxu0 0.0
    %123 = vmatprep.subr.mxu0 0.0
    %124 = vmatpush1.msra.mxu0 0.0
    %125 = vmatprep.subr.mxu0 0.0
    %126 = vmatpush1.msra.mxu0 0.0
    %127 = vmatprep.subr.mxu0 0.0
    %128 = vmatpush1.msra.mxu0 0.0
    %129 = vmatprep.subr.mxu0 0.0
    %130 = vmatpush1.msra.mxu0 0.0
    %131 = vmatprep.subr.mxu0 0.0
    %132 = vmatpush1.msra.mxu0 0.0
    %133 = vmatprep.subr.mxu0 0.0
    %134 = vmatpush1.msra.mxu0 0.0
    %135 = vmatprep.subr.mxu0 0.0
    %136 = vmatpush1.msra.mxu0 0.0
    %137 = vmatprep.subr.mxu0 0.0
    %138 = vmatpush1.msra.mxu0 0.0
    %139 = vmatprep.subr.mxu0 0.0
    %140 = vmatpush1.msra.mxu0 0.0
    %141 = vmatprep.mubr.f32.mxu0 0.0
    %142 = vmatmul.mubr.f32.gmra.mrb[0].mxu0 %v75
    %v143 = vpop.f32.mrb[0].mxu0
    %v144 = vadd.f32 %v71, %v143
    %v145 = vpop.f32.mrb[0].mxu0
    %146 = vdwg.mxu0
    %v147 = vadd.f32 %v144, 3.0
    %v148 = vmax.f32 %v147, 0.0
    %v149 = vmin.f32 %v148, 6.0
    %v150 = vmul.f32 %v144, %v149
    %v151 = vmul.f32 %v150, 0.16666667
    %v152 = vld [vmem:[%s3] sm:$0xff]
    %v153 = vld [vmem:[%s3 + $0x8] sm:$0xff]
    %v154 = vld [vmem:[%s3 + $0x10] sm:$0xff]
    %v155 = vld [vmem:[%s3 + $0x18] sm:$0xff]
    %v156 = vld [vmem:[%s3 + $0x20] sm:$0xff]
    %v157 = vld [vmem:[%s3 + $0x28] sm:$0xff]
    %v158 = vld [vmem:[%s3 + $0x30] sm:$0xff]
    %v159 = vld [vmem:[%s3 + $0x38] sm:$0xff]
    %v160 = vld [vmem:[%s3 + $0x40] sm:$0xff]
    %v161 = vld [vmem:[%s3 + $0x48] sm:$0xff]
    %v162 = vld [vmem:[%s3 + $0x50] sm:$0xff]
    %v163 = vld [vmem:[%s3 + $0x58] sm:$0xff]
    %v164 = vld [vmem:[%s3 + $0x60] sm:$0xff]
    %v165 = vld [vmem:[%s3 + $0x68] sm:$0xff]
    %v166 = vld [vmem:[%s3 + $0x70] sm:$0xff]
    %v167 = vld [vmem:[%s3 + $0x78] sm:$0xff]
    %v168 = vld [vmem:[%s4] sm:$0x1]
    %v170 = vlaneseq
    %v171 = vshrl.u32 %v170, 7
    %v172 = vsub.s32 0, %v171
    %v173 = vrot.slane %v168, %v172
    %175 = vmatprep.subr.mxu0 0.0
    %176 = vmatpush1.msra.mxu0 %v152
    %177 = vmatprep.subr.mxu0 0.0
    %178 = vmatpush1.msra.mxu0 %v153
    %179 = vmatprep.subr.mxu0 0.0
    %180 = vmatpush1.msra.mxu0 %v154
    %181 = vmatprep.subr.mxu0 0.0
    %182 = vmatpush1.msra.mxu0 %v155
    %183 = vmatprep.subr.mxu0 0.0
    %184 = vmatpush1.msra.mxu0 %v156
    %185 = vmatprep.subr.mxu0 0.0
    %186 = vmatpush1.msra.mxu0 %v157
    %187 = vmatprep.subr.mxu0 0.0
    %188 = vmatpush1.msra.mxu0 %v158
    %189 = vmatprep.subr.mxu0 0.0
    %190 = vmatpush1.msra.mxu0 %v159
    %191 = vmatprep.subr.mxu0 0.0
    %192 = vmatpush1.msra.mxu0 %v160
    %193 = vmatprep.subr.mxu0 0.0
    %194 = vmatpush1.msra.mxu0 %v161
    %195 = vmatprep.subr.mxu0 0.0
    %196 = vmatpush1.msra.mxu0 %v162
    %197 = vmatprep.subr.mxu0 0.0
    %198 = vmatpush1.msra.mxu0 %v163
    %199 = vmatprep.subr.mxu0 0.0
    %200 = vmatpush1.msra.mxu0 %v164
    %201 = vmatprep.subr.mxu0 0.0
    %202 = vmatpush1.msra.mxu0 %v165
    %203 = vmatprep.subr.mxu0 0.0
    %204 = vmatpush1.msra.mxu0 %v166
    %205 = vmatprep.subr.mxu0 0.0
    %206 = vmatpush1.msra.mxu0 %v167
    %207 = vmatprep.subr.mxu0 0.0
    %208 = vmatpush1.msra.mxu0 0.0
    %209 = vmatprep.subr.mxu0 0.0
    %210 = vmatpush1.msra.mxu0 0.0
    %211 = vmatprep.subr.mxu0 0.0
    %212 = vmatpush1.msra.mxu0 0.0
    %213 = vmatprep.subr.mxu0 0.0
    %214 = vmatpush1.msra.mxu0 0.0
    %215 = vmatprep.subr.mxu0 0.0
    %216 = vmatpush1.msra.mxu0 0.0
    %217 = vmatprep.subr.mxu0 0.0
    %218 = vmatpush1.msra.mxu0 0.0
    %219 = vmatprep.subr.mxu0 0.0
    %220 = vmatpush1.msra.mxu0 0.0
    %221 = vmatprep.subr.mxu0 0.0
    %222 = vmatpush1.msra.mxu0 0.0
    %223 = vmatprep.subr.mxu0 0.0
    %224 = vmatpush1.msra.mxu0 0.0
    %225 = vmatprep.subr.mxu0 0.0
    %226 = vmatpush1.msra.mxu0 0.0
    %227 = vmatprep.subr.mxu0 0.0
    %228 = vmatpush1.msra.mxu0 0.0
    %229 = vmatprep.subr.mxu0 0.0
    %230 = vmatpush1.msra.mxu0 0.0
    %231 = vmatprep.subr.mxu0 0.0
    %232 = vmatpush1.msra.mxu0 0.0
    %233 = vmatprep.subr.mxu0 0.0
    %234 = vmatpush1.msra.mxu0 0.0
    %235 = vmatprep.subr.mxu0 0.0
    %236 = vmatpush1.msra.mxu0 0.0
    %237 = vmatprep.subr.mxu0 0.0
    %238 = vmatpush1.msra.mxu0 0.0
    %239 = vmatprep.mubr.f32.mxu0 0.0
    %240 = vmatmul.mubr.f32.gmra.mrb[0].mxu0 %v151
    %v241 = vpop.f32.mrb[0].mxu0
    %v242 = vadd.f32 %v173, %v241
    %v243 = vpop.f32.mrb[0].mxu0
    %244 = vdwg.mxu0
    %v245 = vadd.f32 %v242, 3.0
    %v246 = vmax.f32 %v245, 0.0
    %v247 = vmin.f32 %v246, 6.0
    %v248 = vmul.f32 %v242, %v247
    %v249 = vmul.f32 %v248, 0.16666667
    %v250 = vld [vmem:[#allocation5] sm:$0xff]
    %v251 = vld [vmem:[#allocation5 + $0x8] sm:$0xff]
    %v252 = vld [vmem:[#allocation5 + $0x10] sm:$0xff]
    %v253 = vld [vmem:[#allocation5 + $0x18] sm:$0xff]
    %v254 = vld [vmem:[#allocation5 + $0x20] sm:$0xff]
    %v255 = vld [vmem:[#allocation5 + $0x28] sm:$0xff]
    %v256 = vld [vmem:[#allocation5 + $0x30] sm:$0xff]
    %v257 = vld [vmem:[#allocation5 + $0x38] sm:$0xff]
    %v258 = vld [vmem:[#allocation5 + $0x40] sm:$0xff]
    %v259 = vld [vmem:[#allocation5 + $0x48] sm:$0xff]
    %v260 = vld [vmem:[#allocation5 + $0x50] sm:$0xff]
    %v261 = vld [vmem:[#allocation5 + $0x58] sm:$0xff]
    %v262 = vld [vmem:[#allocation5 + $0x60] sm:$0xff]
    %v263 = vld [vmem:[#allocation5 + $0x68] sm:$0xff]
    %v264 = vld [vmem:[#allocation5 + $0x70] sm:$0xff]
    %v265 = vld [vmem:[#allocation5 + $0x78] sm:$0xff]
    %v266 = vld [vmem:[%s6] sm:$0x1]
    %v268 = vlaneseq
    %v269 = vshrl.u32 %v268, 7
    %v270 = vsub.s32 0, %v269
    %v271 = vrot.slane %v266, %v270
    %273 = vmatprep.subr.mxu0 0.0
    %274 = vmatpush1.msra.mxu0 %v250
    %275 = vmatprep.subr.mxu0 0.0
    %276 = vmatpush1.msra.mxu0 %v251
    %277 = vmatprep.subr.mxu0 0.0
    %278 = vmatpush1.msra.mxu0 %v252
    %279 = vmatprep.subr.mxu0 0.0
    %280 = vmatpush1.msra.mxu0 %v253
    %281 = vmatprep.subr.mxu0 0.0
    %282 = vmatpush1.msra.mxu0 %v254
    %283 = vmatprep.subr.mxu0 0.0
    %284 = vmatpush1.msra.mxu0 %v255
    %285 = vmatprep.subr.mxu0 0.0
    %286 = vmatpush1.msra.mxu0 %v256
    %287 = vmatprep.subr.mxu0 0.0
    %288 = vmatpush1.msra.mxu0 %v257
    %289 = vmatprep.subr.mxu0 0.0
    %290 = vmatpush1.msra.mxu0 %v258
    %291 = vmatprep.subr.mxu0 0.0
    %292 = vmatpush1.msra.mxu0 %v259
    %293 = vmatprep.subr.mxu0 0.0
    %294 = vmatpush1.msra.mxu0 %v260
    %295 = vmatprep.subr.mxu0 0.0
    %296 = vmatpush1.msra.mxu0 %v261
    %297 = vmatprep.subr.mxu0 0.0
    %298 = vmatpush1.msra.mxu0 %v262
    %299 = vmatprep.subr.mxu0 0.0
    %300 = vmatpush1.msra.mxu0 %v263
    %301 = vmatprep.subr.mxu0 0.0
    %302 = vmatpush1.msra.mxu0 %v264
    %303 = vmatprep.subr.mxu0 0.0
    %304 = vmatpush1.msra.mxu0 %v265
    %305 = vmatprep.subr.mxu0 0.0
    %306 = vmatpush1.msra.mxu0 0.0
    %307 = vmatprep.subr.mxu0 0.0
    %308 = vmatpush1.msra.mxu0 0.0
    %309 = vmatprep.subr.mxu0 0.0
    %310 = vmatpush1.msra.mxu0 0.0
    %311 = vmatprep.subr.mxu0 0.0
    %312 = vmatpush1.msra.mxu0 0.0
    %313 = vmatprep.subr.mxu0 0.0
    %314 = vmatpush1.msra.mxu0 0.0
    %315 = vmatprep.subr.mxu0 0.0
    %316 = vmatpush1.msra.mxu0 0.0
    %317 = vmatprep.subr.mxu0 0.0
    %318 = vmatpush1.msra.mxu0 0.0
    %319 = vmatprep.subr.mxu0 0.0
    %320 = vmatpush1.msra.mxu0 0.0
    %321 = vmatprep.subr.mxu0 0.0
    %322 = vmatpush1.msra.mxu0 0.0
    %323 = vmatprep.subr.mxu0 0.0
    %324 = vmatpush1.msra.mxu0 0.0
    %325 = vmatprep.subr.mxu0 0.0
    %326 = vmatpush1.msra.mxu0 0.0
    %327 = vmatprep.subr.mxu0 0.0
    %328 = vmatpush1.msra.mxu0 0.0
    %329 = vmatprep.subr.mxu0 0.0
    %330 = vmatpush1.msra.mxu0 0.0
    %331 = vmatprep.subr.mxu0 0.0
    %332 = vmatpush1.msra.mxu0 0.0
    %333 = vmatprep.subr.mxu0 0.0
    %334 = vmatpush1.msra.mxu0 0.0
    %335 = vmatprep.subr.mxu0 0.0
    %336 = vmatpush1.msra.mxu0 0.0
    %337 = vmatprep.mubr.f32.mxu0 0.0
    %338 = vmatmul.mubr.f32.gmra.mrb[0].mxu0 %v249
    %v339 = vpop.f32.mrb[0].mxu0
    %v340 = vadd.f32 %v271, %v339
    %v341 = vpop.f32.mrb[0].mxu0
    %342 = vdwg.mxu0
    %v343 = vadd.f32 %v340, 3.0
    %v344 = vmax.f32 %v343, 0.0
    %v345 = vmin.f32 %v344, 6.0
    %v346 = vmul.f32 %v340, %v345
    %v347 = vmul.f32 %v346, 0.16666667
    %v348 = vld [vmem:[%s7] sm:$0xff]
    %v349 = vld [vmem:[%s7 + $0x8] sm:$0xff]
    %v350 = vld [vmem:[%s7 + $0x10] sm:$0xff]
    %v351 = vld [vmem:[%s7 + $0x18] sm:$0xff]
    %v352 = vld [vmem:[%s7 + $0x20] sm:$0xff]
    %v353 = vld [vmem:[%s7 + $0x28] sm:$0xff]
    %v354 = vld [vmem:[%s7 + $0x30] sm:$0xff]
    %v355 = vld [vmem:[%s7 + $0x38] sm:$0xff]
    %v356 = vld [vmem:[%s7 + $0x40] sm:$0xff]
    %v357 = vld [vmem:[%s7 + $0x48] sm:$0xff]
    %v358 = vld [vmem:[%s7 + $0x50] sm:$0xff]
    %v359 = vld [vmem:[%s7 + $0x58] sm:$0xff]
    %v360 = vld [vmem:[%s7 + $0x60] sm:$0xff]
    %v361 = vld [vmem:[%s7 + $0x68] sm:$0xff]
    %v362 = vld [vmem:[%s7 + $0x70] sm:$0xff]
    %v363 = vld [vmem:[%s7 + $0x78] sm:$0xff]
    %v364 = vld [vmem:[%s8] sm:$0x1]
    %v366 = vlaneseq
    %v367 = vshrl.u32 %v366, 7
    %v368 = vsub.s32 0, %v367
    %v369 = vrot.slane %v364, %v368
    %371 = vmatprep.subr.mxu0 0.0
    %372 = vmatpush1.msra.mxu0 %v348
    %373 = vmatprep.subr.mxu0 0.0
    %374 = vmatpush1.msra.mxu0 %v349
    %375 = vmatprep.subr.mxu0 0.0
    %376 = vmatpush1.msra.mxu0 %v350
    %377 = vmatprep.subr.mxu0 0.0
    %378 = vmatpush1.msra.mxu0 %v351
    %379 = vmatprep.subr.mxu0 0.0
    %380 = vmatpush1.msra.mxu0 %v352
    %381 = vmatprep.subr.mxu0 0.0
    %382 = vmatpush1.msra.mxu0 %v353
    %383 = vmatprep.subr.mxu0 0.0
    %384 = vmatpush1.msra.mxu0 %v354
    %385 = vmatprep.subr.mxu0 0.0
    %386 = vmatpush1.msra.mxu0 %v355
    %387 = vmatprep.subr.mxu0 0.0
    %388 = vmatpush1.msra.mxu0 %v356
    %389 = vmatprep.subr.mxu0 0.0
    %390 = vmatpush1.msra.mxu0 %v357
    %391 = vmatprep.subr.mxu0 0.0
    %392 = vmatpush1.msra.mxu0 %v358
    %393 = vmatprep.subr.mxu0 0.0
    %394 = vmatpush1.msra.mxu0 %v359
    %395 = vmatprep.subr.mxu0 0.0
    %396 = vmatpush1.msra.mxu0 %v360
    %397 = vmatprep.subr.mxu0 0.0
    %398 = vmatpush1.msra.mxu0 %v361
    %399 = vmatprep.subr.mxu0 0.0
    %400 = vmatpush1.msra.mxu0 %v362
    %401 = vmatprep.subr.mxu0 0.0
    %402 = vmatpush1.msra.mxu0 %v363
    %403 = vmatprep.subr.mxu0 0.0
    %404 = vmatpush1.msra.mxu0 0.0
    %405 = vmatprep.subr.mxu0 0.0
    %406 = vmatpush1.msra.mxu0 0.0
    %407 = vmatprep.subr.mxu0 0.0
    %408 = vmatpush1.msra.mxu0 0.0
    %409 = vmatprep.subr.mxu0 0.0
    %410 = vmatpush1.msra.mxu0 0.0
    %411 = vmatprep.subr.mxu0 0.0
    %412 = vmatpush1.msra.mxu0 0.0
    %413 = vmatprep.subr.mxu0 0.0
    %414 = vmatpush1.msra.mxu0 0.0
    %415 = vmatprep.subr.mxu0 0.0
    %416 = vmatpush1.msra.mxu0 0.0
    %417 = vmatprep.subr.mxu0 0.0
    %418 = vmatpush1.msra.mxu0 0.0
    %419 = vmatprep.subr.mxu0 0.0
    %420 = vmatpush1.msra.mxu0 0.0
    %421 = vmatprep.subr.mxu0 0.0
    %422 = vmatpush1.msra.mxu0 0.0
    %423 = vmatprep.subr.mxu0 0.0
    %424 = vmatpush1.msra.mxu0 0.0
    %425 = vmatprep.subr.mxu0 0.0
    %426 = vmatpush1.msra.mxu0 0.0
    %427 = vmatprep.subr.mxu0 0.0
    %428 = vmatpush1.msra.mxu0 0.0
    %429 = vmatprep.subr.mxu0 0.0
    %430 = vmatpush1.msra.mxu0 0.0
    %431 = vmatprep.subr.mxu0 0.0
    %432 = vmatpush1.msra.mxu0 0.0
    %433 = vmatprep.subr.mxu0 0.0
    %434 = vmatpush1.msra.mxu0 0.0
    %435 = vmatprep.mubr.f32.mxu0 0.0
    %436 = vmatmul.mubr.f32.gmra.mrb[0].mxu0 %v347
    %v437 = vpop.f32.mrb[0].mxu0
    %v438 = vadd.f32 %v369, %v437
    %v439 = vpop.f32.mrb[0].mxu0
    %440 = vdwg.mxu0
    %vm441 = vcmask 64512
    %442 = vst.msk [vmem:[#allocation7] sm:$0xff] %vm441, %v438
    // Predicated region
    $region46: #{tpu_custom_call.1} parent=1 // pred_check
      _
    $region47: #{tpu_custom_call.1} parent=1 // pred_check_branch
      %444 = sbr.rel (0) target = $region49
    $region48: #{tpu_custom_call.1} parent=1 // pred_region
      %s446 = ssub.s32 128, 128
      %447 = vsyncadd [#allocation4], %s446
      %s449 = sshll.u32 [#allocation7], 4
      %s450 = int_to_ptr.vmem [resolvable:$true] %s449
      %452 = dma.vmem_to_hbm [thread:$0]  %s450, 128, %s9, [#allocation4]
    $region49: #{tpu_custom_call.1} parent=1 // pred_fallthru
      _
    // Predicated region
    $region50: #{tpu_custom_call.1} parent=1 // pred_check
      _
    $region51: #{tpu_custom_call.1} parent=1 // pred_check_branch
      %454 = sbr.rel (0) target = $region53
    $region52: #{tpu_custom_call.1} parent=1 // pred_region
      %455 = dma.done [#allocation4], 128
    $region53: #{tpu_custom_call.1} parent=1 // pred_fallthru
      _
    %456 = vsyncpa [#allocation3], 1
    %457 = vsyncpa [#allocation6], 1
    %458 = vsyncpa [#allocation4], 1

</llo_original>
